<compile_context>
chip_gen: v5e
topology: v5e:2x2
jax: 0.10.0
libtpu: 0.0.40
codegen_flags: <defaults>
</compile_context>

<pallas_src>
import jax
import jax.numpy as jnp
from jax.experimental import pallas as pl
from jax.experimental.pallas import tpu as pltpu


# Below this many bytes, a Pallas launch can never beat XLA's fused maximum.
_PALLAS_MIN_BYTES = 256 * 1024

# Default lane-dense tile for the scaled-up path (f32: 1 MiB per tile buffer).
_TILE_M = 512
_TILE_N = 512


def _relu_kernel(x_ref, o_ref):
    # Elementwise ReLU on the current VMEM block (pure VPU op).
    o_ref[...] = jnp.maximum(x_ref[...], 0.0)


def relu_pallas_whole_array(x: jax.Array) -> jax.Array:
    """Gridless Pallas ReLU: whole array lives in VMEM, kernel runs once.

    Used for small inputs (e.g. the module's 5x5) where tiling is pointless;
    a non-(8,128)-aligned shape is legal because the block spans the full array.
    """
    return pl.pallas_call(
        _relu_kernel,
        out_shape=jax.ShapeDtypeStruct(x.shape, x.dtype),
        in_specs=[pl.BlockSpec(memory_space=pltpu.MemorySpace.VMEM)],
        out_specs=pl.BlockSpec(memory_space=pltpu.MemorySpace.VMEM),
    )(x)


def relu_pallas_tiled(x: jax.Array, tm: int = _TILE_M, tn: int = _TILE_N) -> jax.Array:
    """2-D tiled Pallas ReLU for large, lane-dense (multiple of (8,128)) inputs.

    512x512 f32 tiles keep double-buffered in+out well under the scoped VMEM
    limit on every generation (v5e 16 MiB, v6e 32 MiB, v7x 32/64 MiB); both
    grid axes are "parallel" so v7x's two TensorCores each take half the grid.
    """
    M, N = x.shape
    tm = min(tm, M)
    tn = min(tn, N)
    grid = (pl.cdiv(M, tm), pl.cdiv(N, tn))
    return pl.pallas_call(
        _relu_kernel,
        out_shape=jax.ShapeDtypeStruct(x.shape, x.dtype),
        grid=grid,
        in_specs=[pl.BlockSpec((tm, tn), lambda i, j: (i, j))],
        out_specs=pl.BlockSpec((tm, tn), lambda i, j: (i, j)),
        compiler_params=pltpu.CompilerParams(
            dimension_semantics=("parallel", "parallel"),
        ),
    )(x)


def my_network_forward(x: jax.Array) -> jax.Array:
    """MyNetwork.forward: ReLU(input), with size-aware dispatch.

    - Tiny tensors: plain jnp.maximum (XLA fuses it; strictly faster than any
      custom-call launch at this size).
    - Large 2-D tensors that tile cleanly into lane-dense blocks: tiled Pallas.
    - Everything else that still warrants a kernel: gridless whole-array Pallas.
    """
    nbytes = x.size * x.dtype.itemsize
    if nbytes < _PALLAS_MIN_BYTES:
        return jnp.maximum(x, 0.0)
    if (
        x.ndim == 2
        and x.shape[0] % 8 == 0
        and x.shape[1] % 128 == 0
    ):
        return relu_pallas_tiled(x)
    return relu_pallas_whole_array(x)


if __name__ == "__main__":
    key = jax.random.PRNGKey(0)
    k_small, k_big = jax.random.split(key)

    # 1) Module-native shape: torch.randn(1, 25).view(5, 5).
    x_small = jax.random.normal(k_small, (1, 25), dtype=jnp.float32).reshape(5, 5)

    # Exercise the gridless Pallas kernel directly at the module's shape.
    out_small_pallas = relu_pallas_whole_array(x_small)
    jax.block_until_ready(out_small_pallas)
    ref_small = jnp.maximum(x_small, 0.0)
    assert out_small_pallas.shape == (5, 5) and out_small_pallas.dtype == jnp.float32
    assert jnp.allclose(out_small_pallas, ref_small), "gridless Pallas ReLU mismatch"

    # Wrapper path for the tiny input (routes to fused jnp.maximum by design).
    out_small_wrap = my_network_forward(x_small)
    jax.block_until_ready(out_small_wrap)
    assert jnp.allclose(out_small_wrap, ref_small), "wrapper ReLU mismatch (small)"

    # 2) Scaled-up, lane-dense input to exercise the tiled Pallas path.
    x_big = jax.random.normal(k_big, (1024, 512), dtype=jnp.float32)
    out_big = my_network_forward(x_big)
    jax.block_until_ready(out_big)
    ref_big = jnp.maximum(x_big, 0.0)
    assert out_big.shape == x_big.shape and out_big.dtype == jnp.float32
    assert jnp.allclose(out_big, ref_big), "tiled Pallas ReLU mismatch"

    print("KERNEL_OK")
</pallas_src>

<mosaic_0001>
module attributes {stable_mosaic.version = 11 : i64} {
  func.func @_relu_kernel(%arg0: memref<5x5xf32, #tpu.memory_space<vmem>>, %arg1: memref<5x5xf32, #tpu.memory_space<vmem>>) attributes {dimension_semantics = [], scalar_prefetch = 0 : i64, scratch_operands = 0 : i64, tpu.core_type = #tpu.core_type<tc>} {
    %c0 = arith.constant 0 : index
    %c0_0 = arith.constant 0 : index
    %0 = vector.load %arg0[%c0, %c0_0] : memref<5x5xf32, #tpu.memory_space<vmem>>, vector<5x5xf32>
    %cst = arith.constant 0.000000e+00 : f32
    %1 = vector.broadcast %cst : f32 to vector<5x5xf32>
    %2 = arith.maximumf %0, %1 : vector<5x5xf32>
    %c0_1 = arith.constant 0 : index
    %c0_2 = arith.constant 0 : index
    %3 = vector.load %arg1[%c0_1, %c0_2] : memref<5x5xf32, #tpu.memory_space<vmem>>, vector<5x5xf32>
    tpu.vector_store %arg1[%c0_1, %c0_2], %2 {strides = array<i32>} : memref<5x5xf32, #tpu.memory_space<vmem>>, vector<5x5xf32>,
    return
  }
}

</mosaic_0001>

<llo_original>
// kernel: tpu_custom_call.1
$region0: #{tpu_custom_call.1}
  #allocation0 [shape = 'u32[]', space=smem, size = 0x4, offset = 0x4, fixed_abs, tag = 'smem constant byte address 0x4 - core index']
  #allocation1 [shape = 'u32[72,128]{1,0:T(1,128)}', space=vmem, size = 0x9000, scoped, tag = 'internal scratch']
  %s0 = inlined_call_operand.hbm [shape: f32[5,5], index: 0, kind: input, shape index: {}]
  %s1 = inlined_call_operand.hbm [shape: f32[5,5], index: 1, kind: output, shape index: {}]
  %s2 = sld [smem:[#allocation0]]
  $region18: #{tpu_custom_call.1} parent=0
    _
  %s4 = ssub.s32 1, %s2
  %s5 = scalar_select 0, %s4, %s2
  $region1: #{tpu_custom_call.1} parent=0
    #allocation2 [shape = 'u8[4096]{0}', space=vmem, size = 0x1000, scoped, tag = 'input window, operand 0, single buffered']
    #allocation3 [shape = 's32[1]{0}', space=sflag, size = 0x4, scoped, tag = 'scoped memory for tpu_custom_call.1']
    #allocation4 [shape = 's32[1]{0}', space=sflag, size = 0x4, scoped, tag = 'scoped memory for tpu_custom_call.1']
    #allocation5 [shape = 'u8[4096]{0}', space=vmem, size = 0x1000, scoped, tag = 'output window, operand 0, single buffered']
    %6 = vsyncpa [#allocation3], 0
    %7 = vsyncpa [#allocation4], 0
    // Predicated region
    $region2: #{tpu_custom_call.1} parent=1 // pred_check
      _
    $region3: #{tpu_custom_call.1} parent=1 // pred_check_branch
      %9 = sbr.rel (0) target = $region5
    $region4: #{tpu_custom_call.1} parent=1 // pred_region
      %11 = vsyncadd [#allocation3], 0
      %s13 = sshll.u32 %s0, 4
      %s14 = int_to_ptr.hbm [resolvable:$true] %s13
      %s15 = sshll.u32 [#allocation2], 4
      %s16 = int_to_ptr.vmem [resolvable:$true] %s15
      %18 = dma.hbm_to_vmem [thread:$0]  %s14, 128, %s16, [#allocation3]
    $region5: #{tpu_custom_call.1} parent=1 // pred_fallthru
      _
    // Predicated region
    $region6: #{tpu_custom_call.1} parent=1 // pred_check
      _
    $region7: #{tpu_custom_call.1} parent=1 // pred_check_branch
      %20 = sbr.rel (0) target = $region9
    $region8: #{tpu_custom_call.1} parent=1 // pred_region
      %22 = dma.done [#allocation3], 128
    $region9: #{tpu_custom_call.1} parent=1 // pred_fallthru
      _
    %v23 = vld [vmem:[#allocation2] sm:$0x1f]
    %v24 = vmax.f32 %v23, 0.0
    %vm25 = vcmask 36864
    %26 = vst.msk [vmem:[#allocation5] sm:$0x1f] %vm25, %v24
    // Predicated region
    $region10: #{tpu_custom_call.1} parent=1 // pred_check
      _
    $region11: #{tpu_custom_call.1} parent=1 // pred_check_branch
      %28 = sbr.rel (0) target = $region13
    $region12: #{tpu_custom_call.1} parent=1 // pred_region
      %30 = vsyncadd [#allocation4], 0
      %s32 = sshll.u32 [#allocation5], 4
      %s33 = int_to_ptr.vmem [resolvable:$true] %s32
      %s34 = sshll.u32 %s1, 4
      %s35 = int_to_ptr.hbm [resolvable:$true] %s34
      %37 = dma.vmem_to_hbm [thread:$0]  %s33, 128, %s35, [#allocation4]
    $region13: #{tpu_custom_call.1} parent=1 // pred_fallthru
      _
    // Predicated region
    $region14: #{tpu_custom_call.1} parent=1 // pred_check
      _
    $region15: #{tpu_custom_call.1} parent=1 // pred_check_branch
      %39 = sbr.rel (0) target = $region17
    $region16: #{tpu_custom_call.1} parent=1 // pred_region
      %41 = dma.done [#allocation4], 128
    $region17: #{tpu_custom_call.1} parent=1 // pred_fallthru
      _
    %42 = vsyncpa [#allocation3], 1
    %43 = vsyncpa [#allocation4], 1

</llo_original>
